<compile_context>
chip_gen: v7x
topology: tpu7x:2x2x1
jax: 0.10.0
libtpu: 0.0.40
codegen_flags: <defaults>
</compile_context>

<pallas_src>
import math

import jax
import jax.numpy as jnp
from jax.experimental import pallas as pl
from jax.experimental.pallas import tpu as pltpu

_TILE_BUDGET_BYTES = 4 << 20   # per-input-tile byte budget (double buffered)
_VMEM_LIMIT_BYTES = 48 << 20   # explicit scoped-VMEM limit (fits all gens)


def _crop_copy_kernel(x_ref, o_ref):
    # Works for both the 2-D (lane-dense) and 3-D (row-tiled) layouts: copy the
    # leading o_ref.shape[-1] columns of the input tile (static slice; a no-op
    # when the input tile already holds only the kept columns).
    o_ref[...] = x_ref[..., : o_ref.shape[-1]]


def _round_down(x, m):
    return (x // m) * m


def _crop_tensor(x, block_size, tile_budget=_TILE_BUDGET_BYTES):
    *lead, H, W = x.shape
    h = (H // block_size) * block_size
    w = (W // block_size) * block_size

    # Fast path: nothing to crop -> return the input untouched (zero HBM traffic).
    if h == H and w == W:
        return x
    # Degenerate crop: nothing survives, plain slicing is enough.
    if h == 0 or w == 0:
        return x[..., :h, :w]

    n = math.prod(lead) if lead else 1
    itemsize = jnp.dtype(x.dtype).itemsize
    # Sublane packing: 8 rows for 32-bit, 16 for 16-bit, 32 for 8-bit dtypes.
    sub = max(8, 8 * (4 // itemsize))

    params = pltpu.CompilerParams(
        dimension_semantics=("parallel", "parallel"),
        vmem_limit_bytes=_VMEM_LIMIT_BYTES,
    )

    # ---- Height-only crop: the kept region of each image is one contiguous
    # chunk of h*W elements -> copy it with a lane-dense 2-D layout.
    if w == W and h * W >= 128:
        hw = h * W
        x2 = x.reshape(n, H * W)
        col_cap = max(128, _round_down(tile_budget // (itemsize * min(n, sub)), 128))
        tc = min(_round_down(hw, 128), col_cap)
        if n * tc * itemsize <= tile_budget:
            bn = n                                   # full dim -> always legal
        else:
            bn = max(sub, _round_down(tile_budget // (tc * itemsize), sub))
        grid = (pl.cdiv(n, bn), pl.cdiv(hw, tc))
        out2 = pl.pallas_call(
            _crop_copy_kernel,
            out_shape=jax.ShapeDtypeStruct((n, hw), x.dtype),
            grid_spec=pltpu.PrefetchScalarGridSpec(
                num_scalar_prefetch=0,
                grid=grid,
                in_specs=[pl.BlockSpec((bn, tc), lambda b, j: (b, j))],
                out_specs=pl.BlockSpec((bn, tc), lambda b, j: (b, j)),
            ),
            compiler_params=params,
        )(x2)
        return out2.reshape(*lead, h, w)

    # ---- General path: 3-D strided copy over an (image-block, row-block) grid.
    if h < sub:
        # Too few kept rows for a sublane-aligned tile; plain slicing is cheapest
        # and avoids an illegal (non-aligned, non-full) block.
        return x[..., :h, :w]

    x3 = x.reshape(n, H, W)
    # Read only the kept columns when that keeps the input block lane-legal
    # (multiple of 128); otherwise read full rows and drop the tail in VMEM.
    read_cols = w if (w % 128 == 0) else W
    row_bytes = read_cols * itemsize
    th = min(_round_down(h, sub),
             _round_down(max(tile_budget // row_bytes, sub), sub))
    th = max(th, sub)
    bn = max(1, min(n, tile_budget // (th * row_bytes)))
    # v7x has two TensorCores: keep at least two blocks on a parallel axis.
    if pl.cdiv(n, bn) * pl.cdiv(h, th) == 1 and n >= 2:
        bn = pl.cdiv(n, 2)
    grid = (pl.cdiv(n, bn), pl.cdiv(h, th))

    out3 = pl.pallas_call(
        _crop_copy_kernel,
        out_shape=jax.ShapeDtypeStruct((n, h, w), x.dtype),
        grid_spec=pltpu.PrefetchScalarGridSpec(
            num_scalar_prefetch=0,
            grid=grid,
            in_specs=[pl.BlockSpec((bn, th, read_cols), lambda b, i: (b, i, 0))],
            out_specs=pl.BlockSpec((bn, th, w), lambda b, i: (b, i, 0)),
        ),
        compiler_params=params,
    )(x3)
    return out3.reshape(*lead, h, w)


def crop_block_dividable(batch, block_size=16):
    """Pallas port of CropBlockDividable.forward.

    `batch` is a dict of arrays (the PyTorch version mutates the dict in
    place; here we return a new dict with every tensor cropped so its trailing
    H, W dims are multiples of `block_size`)."""
    return {name: _crop_tensor(t, block_size) for name, t in batch.items()}


if __name__ == "__main__":
    key = jax.random.PRNGKey(0)
    k1, k2, k3, k4 = jax.random.split(key, 4)

    block_size = 16
    batch = {
        # Both spatial dims non-divisible: general 3-D copy path.
        "image": jax.random.normal(k1, (2, 4, 19, 21), dtype=jnp.float32),
        # Already divisible: identity fast path (no kernel launched).
        "mask": jax.random.normal(k2, (2, 4, 16, 16), dtype=jnp.float32),
        # Height-only crop: lane-dense 2-D fast path.
        "depth": jax.random.normal(k3, (2, 4, 19, 16), dtype=jnp.float32),
        # bf16 tensor exercising dtype-aware sublane alignment.
        "feat": jax.random.normal(k4, (2, 4, 35, 21), dtype=jnp.bfloat16),
    }

    out = crop_block_dividable(batch, block_size=block_size)
    out = jax.block_until_ready(out)

    for name, x in batch.items():
        H, W = x.shape[-2:]
        h = H // block_size * block_size
        w = W // block_size * block_size
        ref = x[..., :h, :w]
        assert out[name].shape == ref.shape, (name, out[name].shape, ref.shape)
        assert out[name].dtype == ref.dtype, (name, out[name].dtype, ref.dtype)
        assert bool(jnp.array_equal(out[name], ref)), f"crop mismatch for {name}"

    print("KERNEL_OK")
</pallas_src>

<mosaic_0001>
module attributes {stable_mosaic.version = 11 : i64} {
  func.func @_crop_copy_kernel(%arg0: i32, %arg1: i32, %arg2: memref<4x16x21xf32, #tpu.memory_space<vmem>>, %arg3: memref<4x16x16xf32, #tpu.memory_space<vmem>>) attributes {dimension_semantics = [#tpu.dimension_semantics<parallel>, #tpu.dimension_semantics<parallel>], iteration_bounds = array<i64: 2, 1>, scalar_prefetch = 0 : i64, scratch_operands = 0 : i64, tpu.core_type = #tpu.core_type<tc>, window_params = [{transform_indices = @transform_0, window_bounds = array<i64: 4, 16, 21>}, {transform_indices = @transform_1, window_bounds = array<i64: 4, 16, 16>}]} {
    %c0 = arith.constant 0 : index
    %c0_0 = arith.constant 0 : index
    %c0_1 = arith.constant 0 : index
    %0 = vector.load %arg2[%c0, %c0_0, %c0_1] : memref<4x16x21xf32, #tpu.memory_space<vmem>>, vector<4x16x16xf32>
    %c0_2 = arith.constant 0 : index
    %c0_3 = arith.constant 0 : index
    %c0_4 = arith.constant 0 : index
    %1 = vector.load %arg3[%c0_2, %c0_3, %c0_4] : memref<4x16x16xf32, #tpu.memory_space<vmem>>, vector<4x16x16xf32>
    tpu.vector_store %arg3[%c0_2, %c0_3, %c0_4], %0 {strides = array<i32>} : memref<4x16x16xf32, #tpu.memory_space<vmem>>, vector<4x16x16xf32>,
    return
  }
  func.func @transform_0(%arg0: i32, %arg1: i32) -> (i32, i32, i32) {
    %c0_i32 = arith.constant 0 : i32
    %c0_i32_0 = arith.constant 0 : i32
    return %arg0, %arg1, %c0_i32 : i32, i32, i32
  }
  func.func @transform_1(%arg0: i32, %arg1: i32) -> (i32, i32, i32) {
    %c0_i32 = arith.constant 0 : i32
    %c0_i32_0 = arith.constant 0 : i32
    return %arg0, %arg1, %c0_i32 : i32, i32, i32
  }
}

</mosaic_0001>

<llo_original>
// kernel: tpu_custom_call.1
$region0: #{tpu_custom_call.1}
  #allocation0 [shape = 'u32[]', space=smem, size = 0x4, offset = 0x4, fixed_abs, tag = 'smem constant byte address 0x4 - core index']
  #allocation1 [shape = 'u32[144,128]{1,0:T(1,128)}', space=vmem, size = 0x12000, scoped, tag = 'internal scratch']
  %s0 = inlined_call_operand.vmem [shape: f32[8,19,21], index: 0, kind: input, shape index: {}]
  %s1 = inlined_call_operand.hbm [shape: f32[8,16,16], index: 1, kind: output, shape index: {}]
  %s2 = sld [smem:[#allocation0]]
  $region89: #{tpu_custom_call.1} parent=0
    _
  %s4 = ssub.s32 1, %s2
  %s5 = scalar_select 0, %s4, %s2
  $region1: #{tpu_custom_call.1} parent=0
    #allocation2 [shape = 'u8[65536]{0}', space=vmem, size = 0x10000, scoped, tag = 'input window, operand 0']
    #allocation3 [shape = 'u8[65536]{0}', space=vmem, size = 0x10000, scoped, tag = 'output window, operand 0']
    #allocation4 [shape = 's32[2]{0}', space=sflag, size = 0x8, scoped, tag = 'scoped memory for tpu_custom_call.1']
    %6 = vsyncpa [#allocation4], 0
    %s7 = scalar_lea.sflag [#allocation4], 1
    %8 = vsyncpa %s7, 0
    loop: start=0, step=1, limit=4
    $region2: #{tpu_custom_call.1} parent=1 // loop_pre_header
      _
    $region3: #{tpu_custom_call.1} parent=1 // loop_header
      %s10 = sphi 0, %s14
      %p11 = scmp.ge.s32.totalorder %s10, 4
      %s17 = sphi 0, %s29
      %s18 = sphi 0, %s25
      %s19 = sphi 0, %s17
      %s20 = sphi 0, %s18
      %s21 = sphi 0, %s19
      %s22 = sphi 0, %s20
      %s34 = sphi 0, %s36
      %s37 = sphi 0, %s34
      %s38 = sphi 0, %s37
      %s54 = sphi 0, %s38
      %s62 = sphi 0, %s64
      %s65 = sphi 0, %s62
      %s66 = sphi 0, %s65
      %s82 = sphi 0, %s66
    $region4: #{tpu_custom_call.1} parent=1 // loop_header_branch
      %13 = sbr.rel (%p11) target = $region8
    $region5: #{tpu_custom_call.1} parent=1 // loop_body
      %s15 = ssub.s32 %s10, 1
      %s16 = ssub.s32 %s10, 2
      %s23 = sadd.s32 1, %s18
      %p24 = scmp.ge.s32.totalorder %s23, 1
      %s25 = scalar_select %p24, 0, %s23
      %s26 = sadd.s32 1, %s17
      %s27 = scalar_select %p24, %s26, %s17
      %p28 = scmp.ge.s32.totalorder %s27, 2
      %s29 = scalar_select %p28, 0, %s27
      %s30 = ssub.s32 %s17, %s29
      %s31 = ssub.s32 %s18, %s25
      %s32 = sor.u32 %s30, %s31
      %p33 = scmp.eq.s32.totalorder %s32, 0
      %s35 = sadd.s32 %s34, 1
      %s36 = scalar_select %p33, %s34, %s35
      %p39 = pneg %p33
      %p40 = scmp.eq.s32.totalorder %s10, 1
      %p41 = por %p39, %p40
      %p42 = scmp.ne.s32.totalorder %s34, %s37
      %p43 = scmp.eq.s32.totalorder %s10, 0
      %p44 = por %p42, %p43
      %p45 = scmp.ne.s32.totalorder %s34, %s37
      %p46 = scmp.eq.s32.totalorder %s15, 1
      %p47 = por %p45, %p46
      %p48 = scmp.ne.s32.totalorder %s37, %s38
      %p49 = scmp.eq.s32.totalorder %s15, 0
      %p50 = por %p48, %p49
      %p51 = scmp.ne.s32.totalorder %s37, %s38
      %p52 = scmp.eq.s32.totalorder %s16, 1
      %p53 = por %p51, %p52
      %p55 = scmp.ne.s32.totalorder %s38, %s54
      %p56 = scmp.eq.s32.totalorder %s16, 0
      %p57 = por %p55, %p56
      %s58 = ssub.s32 %s17, %s29
      %s59 = ssub.s32 %s18, %s25
      %s60 = sor.u32 %s58, %s59
      %p61 = scmp.eq.s32.totalorder %s60, 0
      %s63 = sadd.s32 %s62, 1
      %s64 = scalar_select %p61, %s62, %s63
      %p67 = pneg %p61
      %p68 = scmp.eq.s32.totalorder %s10, 1
      %p69 = por %p67, %p68
      %p70 = scmp.ne.s32.totalorder %s62, %s65
      %p71 = scmp.eq.s32.totalorder %s10, 0
      %p72 = por %p70, %p71
      %p73 = scmp.ne.s32.totalorder %s62, %s65
      %p74 = scmp.eq.s32.totalorder %s15, 1
      %p75 = por %p73, %p74
      %p76 = scmp.ne.s32.totalorder %s65, %s66
      %p77 = scmp.eq.s32.totalorder %s15, 0
      %p78 = por %p76, %p77
      %p79 = scmp.ne.s32.totalorder %s65, %s66
      %p80 = scmp.eq.s32.totalorder %s16, 1
      %p81 = por %p79, %p80
      %p83 = scmp.ne.s32.totalorder %s66, %s82
      %p84 = scmp.eq.s32.totalorder %s16, 0
      %p85 = por %p83, %p84
      %p86 = scmp.le.s32.totalorder 1, %s10
      %p87 = scmp.lt.s32.totalorder %s10, 3
      %p88 = pnand %p86, %p87
      %p89 = pneg %p88
      // Predicated region
      $region9: #{tpu_custom_call.1} parent=5 // pred_check
        _
      $region10: #{tpu_custom_call.1} parent=5 // pred_check_branch
        %91 = sbr.rel (%p88) target = $region12
      $region11: #{tpu_custom_call.1} parent=5 // pred_region
        %s92 = ssub.s32 %s10, 1
      $region12: #{tpu_custom_call.1} parent=5 // pred_fallthru
        _
      %p93 = scmp.lt.s32.totalorder %s10, 2
      // Predicated region
      $region13: #{tpu_custom_call.1} parent=5 // pred_check
        %p94 = pneg %p93
      $region14: #{tpu_custom_call.1} parent=5 // pred_check_branch
        %96 = sbr.rel (%p94) target = $region16
      $region15: #{tpu_custom_call.1} parent=5 // pred_region
        // Predicated region
        $region17: #{tpu_custom_call.1} parent=15 // pred_check
          %p97 = pneg %p44
        $region18: #{tpu_custom_call.1} parent=15 // pred_check_branch
          %99 = sbr.rel (%p97) target = $region20
        $region19: #{tpu_custom_call.1} parent=15 // pred_region
          %s100 = sand.u32 %s34, 1
          %s101 = sand.u32 %s34, 1
          %s102 = smul.addr %s101, 64
          %s103 = scalar_lea.vmem [#allocation2], %s102
          %s104 = smul.u32 4, %s17
          %s105 = smul.u32 2, %s18
          %s106 = ssub.s32 3, %s105
          %p107 = scmp.lt.s32.totalorder %s106, 2
          %s108 = scalar_select %p107, %s106, 2
          %s109 = smul.u32 512, %s108
          %p110 = scmp.ne.s32.totalorder 0, %s109
          %s111 = smul.addr %s104, 3
          %s112 = sadd.s32 %s105, %s111
          %s113 = smul.addr %s112, 8
          %s114 = scalar_lea.vmem %s0, %s113
          // Predicated region
          $region21: #{tpu_custom_call.1} parent=19 // pred_check
            %p115 = pneg %p110
          $region22: #{tpu_custom_call.1} parent=19 // pred_check_branch
            %117 = sbr.rel (%p115) target = $region24
          $region23: #{tpu_custom_call.1} parent=19 // pred_region
            // Predicated region
            $region25: #{tpu_custom_call.1} parent=23 // pred_check
              _
            $region26: #{tpu_custom_call.1} parent=23 // pred_check_branch
              %119 = sbr.rel (0) target = $region28
            $region27: #{tpu_custom_call.1} parent=23 // pred_region
              // Predicated region
              $region47: #{tpu_custom_call.1} parent=27 // pred_check
                _
              $region48: #{tpu_custom_call.1} parent=27 // pred_check_branch
                %188 = sbr.rel (0) target = $region50
              $region49: #{tpu_custom_call.1} parent=27 // pred_region
                %s189 = sshrl.u32 %s108, 1
                // While loop
                $region51: #{tpu_custom_call.1} parent=49 // loop_pre_header
                  _
                $region52: #{tpu_custom_call.1} parent=49 // loop_header
                  %s191 = sphi 0, %s193
                  %p192 = scmp.ge.s32.totalorder %s191, %s189
                  %s196 = sphi 0, %s217
                  %s197 = sphi %s114, %s220
                  %s198 = sphi %s103, %s221
                $region53: #{tpu_custom_call.1} parent=49 // loop_header_branch
                  %195 = sbr.rel (%p192) target = $region57
                $region54: #{tpu_custom_call.1} parent=49 // loop_body
                  %v199 = vld [vmem:[%s197] sm:$0xff]
                  %200 = vst [vmem:[%s198] sm:$0xff] %v199
                  %v201 = vld [vmem:[%s197 + $0x8] sm:$0xff]
                  %202 = vst [vmem:[%s198 + $0x8] sm:$0xff] %v201
                  %v203 = vld [vmem:[%s197 + $0x18] sm:$0xff]
                  %204 = vst [vmem:[%s198 + $0x10] sm:$0xff] %v203
                  %v205 = vld [vmem:[%s197 + $0x20] sm:$0xff]
                  %206 = vst [vmem:[%s198 + $0x18] sm:$0xff] %v205
                  %v207 = vld [vmem:[%s197 + $0x30] sm:$0xff]
                  %208 = vst [vmem:[%s198 + $0x20] sm:$0xff] %v207
                  %v209 = vld [vmem:[%s197 + $0x38] sm:$0xff]
                  %210 = vst [vmem:[%s198 + $0x28] sm:$0xff] %v209
                  %v211 = vld [vmem:[%s197 + $0x48] sm:$0xff]
                  %212 = vst [vmem:[%s198 + $0x30] sm:$0xff] %v211
                  %v213 = vld [vmem:[%s197 + $0x50] sm:$0xff]
                  %214 = vst [vmem:[%s198 + $0x38] sm:$0xff] %v213
                  %s215 = sadd.s32 1, %s196
                  %p216 = scmp.ge.s32.totalorder %s215, %s189
                  %s217 = scalar_select %p216, 0, %s215
                  %s218 = smul.u32 %s217, 16
                  %s219 = smul.u32 %s217, 16
                  %s220 = scalar_lea.vmem %s114, %s218
                  %s221 = scalar_lea.vmem %s103, %s219 [#allocation2]
                $region55: #{tpu_custom_call.1} parent=49 // loop_footer
                  %s193 = sadd.s32 %s191, 1
                $region56: #{tpu_custom_call.1} parent=49 // loop_footer_branch
                  %190 = sbr.rel target = $region52
                $region57: #{tpu_custom_call.1} parent=49 // loop_exit
                  _
                %s222 = sshrl.u32 %s108, 1
                %s223 = sand.u32 %s108, 1
                %s224 = smul.u32 %s222, 2
                %s225 = smul.u32 8, %s224
                %s226 = scalar_lea.vmem %s114, %s225
                %s227 = smul.u32 8, %s224
                %s228 = scalar_lea.vmem %s103, %s227 [#allocation2]
                // While loop
                $region58: #{tpu_custom_call.1} parent=49 // loop_pre_header
                  _
                $region59: #{tpu_custom_call.1} parent=49 // loop_header
                  %s230 = sphi 0, %s232
                  %p231 = scmp.ge.s32.totalorder %s230, %s223
                  %s235 = sphi 0, %s248
                  %s236 = sphi %s226, %s251
                  %s237 = sphi %s228, %s252
                $region60: #{tpu_custom_call.1} parent=49 // loop_header_branch
                  %234 = sbr.rel (%p231) target = $region64
                $region61: #{tpu_custom_call.1} parent=49 // loop_body
                  %v238 = vld [vmem:[%s236] sm:$0xff]
                  %239 = vst [vmem:[%s237] sm:$0xff] %v238
                  %v240 = vld [vmem:[%s236 + $0x18] sm:$0xff]
                  %241 = vst [vmem:[%s237 + $0x10] sm:$0xff] %v240
                  %v242 = vld [vmem:[%s236 + $0x30] sm:$0xff]
                  %243 = vst [vmem:[%s237 + $0x20] sm:$0xff] %v242
                  %v244 = vld [vmem:[%s236 + $0x48] sm:$0xff]
                  %245 = vst [vmem:[%s237 + $0x30] sm:$0xff] %v244
                  %s246 = sadd.s32 1, %s235
                  %p247 = scmp.ge.s32.totalorder %s246, %s223
                  %s248 = scalar_select %p247, 0, %s246
                  %s249 = smul.u32 %s248, 8
                  %s250 = smul.u32 %s248, 8
                  %s251 = scalar_lea.vmem %s226, %s249
                  %s252 = scalar_lea.vmem %s228, %s250 [#allocation2]
                $region62: #{tpu_custom_call.1} parent=49 // loop_footer
                  %s232 = sadd.s32 %s230, 1
                $region63: #{tpu_custom_call.1} parent=49 // loop_footer_branch
                  %229 = sbr.rel target = $region59
                $region64: #{tpu_custom_call.1} parent=49 // loop_exit
                  _
              $region50: #{tpu_custom_call.1} parent=27 // pred_fallthru
                _
              // Predicated region
              $region65: #{tpu_custom_call.1} parent=27 // pred_check
                _
              $region66: #{tpu_custom_call.1} parent=27 // pred_check_branch
                %254 = sbr.rel target = $region68
              $region67: #{tpu_custom_call.1} parent=27 // pred_region
                _
              $region68: #{tpu_custom_call.1} parent=27 // pred_fallthru
                _
            $region28: #{tpu_custom_call.1} parent=23 // pred_fallthru
              _
            // Predicated region
            $region29: #{tpu_custom_call.1} parent=23 // pred_check
              _
            $region30: #{tpu_custom_call.1} parent=23 // pred_check_branch
              %121 = sbr.rel target = $region32
            $region31: #{tpu_custom_call.1} parent=23 // pred_region
              %s123 = sshrl.u32 %s108, 1
              // While loop
              $region33: #{tpu_custom_call.1} parent=31 // loop_pre_header
                _
              $region34: #{tpu_custom_call.1} parent=31 // loop_header
                %s125 = sphi 0, %s127
                %p126 = scmp.ge.s32.totalorder %s125, %s123
                %s130 = sphi 0, %s151
                %s131 = sphi %s114, %s154
                %s132 = sphi %s103, %s155
              $region35: #{tpu_custom_call.1} parent=31 // loop_header_branch
                %129 = sbr.rel (%p126) target = $region39
              $region36: #{tpu_custom_call.1} parent=31 // loop_body
                %v133 = vld [vmem:[%s131] sm:$0xff]
                %134 = vst [vmem:[%s132] sm:$0xff] %v133
                %v135 = vld [vmem:[%s131 + $0x8] sm:$0xff]
                %136 = vst [vmem:[%s132 + $0x8] sm:$0xff] %v135
                %v137 = vld [vmem:[%s131 + $0x18] sm:$0xff]
                %138 = vst [vmem:[%s132 + $0x10] sm:$0xff] %v137
                %v139 = vld [vmem:[%s131 + $0x20] sm:$0xff]
                %140 = vst [vmem:[%s132 + $0x18] sm:$0xff] %v139
                %v141 = vld [vmem:[%s131 + $0x30] sm:$0xff]
                %142 = vst [vmem:[%s132 + $0x20] sm:$0xff] %v141
                %v143 = vld [vmem:[%s131 + $0x38] sm:$0xff]
                %144 = vst [vmem:[%s132 + $0x28] sm:$0xff] %v143
                %v145 = vld [vmem:[%s131 + $0x48] sm:$0xff]
                %146 = vst [vmem:[%s132 + $0x30] sm:$0xff] %v145
                %v147 = vld [vmem:[%s131 + $0x50] sm:$0xff]
                %148 = vst [vmem:[%s132 + $0x38] sm:$0xff] %v147
                %s149 = sadd.s32 1, %s130
                %p150 = scmp.ge.s32.totalorder %s149, %s123
                %s151 = scalar_select %p150, 0, %s149
                %s152 = smul.u32 %s151, 16
                %s153 = smul.u32 %s151, 16
                %s154 = scalar_lea.vmem %s114, %s152
                %s155 = scalar_lea.vmem %s103, %s153 [#allocation2]
              $region37: #{tpu_custom_call.1} parent=31 // loop_footer
                %s127 = sadd.s32 %s125, 1
              $region38: #{tpu_custom_call.1} parent=31 // loop_footer_branch
                %124 = sbr.rel target = $region34
              $region39: #{tpu_custom_call.1} parent=31 // loop_exit
                _
              %s156 = sshrl.u32 %s108, 1
              %s157 = sand.u32 %s108, 1
              %s158 = smul.u32 %s156, 2
              %s159 = smul.u32 8, %s158
              %s160 = scalar_lea.vmem %s114, %s159
              %s161 = smul.u32 8, %s158
              %s162 = scalar_lea.vmem %s103, %s161 [#allocation2]
              // While loop
              $region40: #{tpu_custom_call.1} parent=31 // loop_pre_header
                _
              $region41: #{tpu_custom_call.1} parent=31 // loop_header
                %s164 = sphi 0, %s166
                %p165 = scmp.ge.s32.totalorder %s164, %s157
                %s169 = sphi 0, %s182
                %s170 = sphi %s160, %s185
                %s171 = sphi %s162, %s186
              $region42: #{tpu_custom_call.1} parent=31 // loop_header_branch
                %168 = sbr.rel (%p165) target = $region46
              $region43: #{tpu_custom_call.1} parent=31 // loop_body
                %v172 = vld [vmem:[%s170] sm:$0xff]
                %173 = vst [vmem:[%s171] sm:$0xff] %v172
                %v174 = vld [vmem:[%s170 + $0x18] sm:$0xff]
                %175 = vst [vmem:[%s171 + $0x10] sm:$0xff] %v174
                %v176 = vld [vmem:[%s170 + $0x30] sm:$0xff]
                %177 = vst [vmem:[%s171 + $0x20] sm:$0xff] %v176
                %v178 = vld [vmem:[%s170 + $0x48] sm:$0xff]
                %179 = vst [vmem:[%s171 + $0x30] sm:$0xff] %v178
                %s180 = sadd.s32 1, %s169
                %p181 = scmp.ge.s32.totalorder %s180, %s157
                %s182 = scalar_select %p181, 0, %s180
                %s183 = smul.u32 %s182, 8
                %s184 = smul.u32 %s182, 8
                %s185 = scalar_lea.vmem %s160, %s183
                %s186 = scalar_lea.vmem %s162, %s184 [#allocation2]
              $region44: #{tpu_custom_call.1} parent=31 // loop_footer
                %s166 = sadd.s32 %s164, 1
              $region45: #{tpu_custom_call.1} parent=31 // loop_footer_branch
                %163 = sbr.rel target = $region41
              $region46: #{tpu_custom_call.1} parent=31 // loop_exit
                _
            $region32: #{tpu_custom_call.1} parent=23 // pred_fallthru
              _
          $region24: #{tpu_custom_call.1} parent=19 // pred_fallthru
            _
          %255 = vnop
        $region20: #{tpu_custom_call.1} parent=15 // pred_fallthru
          _
      $region16: #{tpu_custom_call.1} parent=5 // pred_fallthru
        _
      %p256 = scmp.le.s32.totalorder 1, %s10
      %p257 = scmp.lt.s32.totalorder %s10, 3
      %p258 = pnand %p256, %p257
      %p259 = pneg %p258
      // Predicated region
      $region69: #{tpu_custom_call.1} parent=5 // pred_check
        _
      $region70: #{tpu_custom_call.1} parent=5 // pred_check_branch
        %261 = sbr.rel (%p258) target = $region72
      $region71: #{tpu_custom_call.1} parent=5 // pred_region
        %s262 = ssub.s32 %s10, 1
        %s263 = sand.u32 %s37, 1
        %s264 = sand.u32 %s37, 1
        %s265 = smul.addr %s264, 64
        %s266 = scalar_lea.vmem [#allocation2], %s265
        // Predicated region
        $region73: #{tpu_custom_call.1} parent=71 // pred_check
          %p267 = pneg %p50
        $region74: #{tpu_custom_call.1} parent=71 // pred_check_branch
          %269 = sbr.rel (%p267) target = $region76
        $region75: #{tpu_custom_call.1} parent=71 // pred_region
          _
        $region76: #{tpu_custom_call.1} parent=71 // pred_fallthru
          _
        %s270 = sand.u32 %s37, 1
        %s271 = sand.u32 %s37, 1
        %s272 = smul.addr %s271, 64
        %s273 = scalar_lea.vmem [#allocation2], %s272
        %p274 = pneg %p50
        %p275 = pneg %p47
        %p276 = pneg %p78
        %p277 = pneg %p75
        %s278 = sand.u32 %s65, 1
        %s279 = scalar_lea.sflag [#allocation4], %s278
        %s280 = sand.u32 %s65, 1
        %s281 = smul.addr %s280, 64
        %s282 = scalar_lea.vmem [#allocation3], %s281
        %s283 = smul.u32 4, %s19
        %s284 = smul.u32 2, %s20
        %s285 = ssub.s32 3, %s284
        %p286 = scmp.lt.s32.totalorder %s285, 2
        %s287 = scalar_select %p286, %s285, 2
        %s288 = smul.u32 512, %s287
        %s289 = smul.u32 4, %s19
        %s290 = smul.u32 2, %s20
        %v291 = vld [vmem:[%s266] sm:$0xff]
        %v292 = vld [vmem:[%s266 + $0x8] sm:$0xff]
        %v293 = vld [vmem:[%s266 + $0x10] sm:$0xff]
        %v294 = vld [vmem:[%s266 + $0x18] sm:$0xff]
        %v295 = vld [vmem:[%s266 + $0x20] sm:$0xff]
        %v296 = vld [vmem:[%s266 + $0x28] sm:$0xff]
        %v297 = vld [vmem:[%s266 + $0x30] sm:$0xff]
        %v298 = vld [vmem:[%s266 + $0x38] sm:$0xff]
        %vm299 = vcmask 130048
        %300 = vst.msk [vmem:[%s282] sm:$0xff] %vm299, %v291
        %301 = vst.msk [vmem:[%s282 + $0x8] sm:$0xff] %vm299, %v292
        %302 = vst.msk [vmem:[%s282 + $0x10] sm:$0xff] %vm299, %v293
        %303 = vst.msk [vmem:[%s282 + $0x18] sm:$0xff] %vm299, %v294
        %304 = vst.msk [vmem:[%s282 + $0x20] sm:$0xff] %vm299, %v295
        %305 = vst.msk [vmem:[%s282 + $0x28] sm:$0xff] %vm299, %v296
        %306 = vst.msk [vmem:[%s282 + $0x30] sm:$0xff] %vm299, %v297
        %307 = vst.msk [vmem:[%s282 + $0x38] sm:$0xff] %vm299, %v298
        %s308 = sand.u32 %s65, 1
        %s309 = scalar_lea.sflag [#allocation4], %s308
        %s310 = sand.u32 %s65, 1
        %s311 = smul.addr %s310, 64
        %s312 = scalar_lea.vmem [#allocation3], %s311
        // Predicated region
        $region77: #{tpu_custom_call.1} parent=71 // pred_check
          %p313 = pneg %p75
        $region78: #{tpu_custom_call.1} parent=71 // pred_check_branch
          %315 = sbr.rel (%p313) target = $region80
        $region79: #{tpu_custom_call.1} parent=71 // pred_region
          %s316 = smul.u32 4, %s19
          %s317 = smul.u32 2, %s20
          %s319 = ssub.s32 1024, 1024
          %320 = vsyncadd %s309, %s319
          %s321 = smul.addr %s316, 2
          %s322 = sadd.s32 %s317, %s321
          %s323 = smul.addr %s322, 128
          %s324 = scalar_lea.hbm %s1, %s323
          %s325 = sshll.u32 %s312, 4
          %s326 = int_to_ptr.vmem [resolvable:$true] %s325
          %331 = dma.vmem_to_hbm [thread:$0]  %s326, 1024, %s324, %s309, 128, 128, 8
        $region80: #{tpu_custom_call.1} parent=71 // pred_fallthru
          _
      $region72: #{tpu_custom_call.1} parent=5 // pred_fallthru
        _
      %p332 = scmp.le.s32.totalorder 2, %s10
      // Predicated region
      $region81: #{tpu_custom_call.1} parent=5 // pred_check
        %p333 = pneg %p332
      $region82: #{tpu_custom_call.1} parent=5 // pred_check_branch
        %335 = sbr.rel (%p333) target = $region84
      $region83: #{tpu_custom_call.1} parent=5 // pred_region
        %s336 = ssub.s32 %s10, 2
        // Predicated region
        $region85: #{tpu_custom_call.1} parent=83 // pred_check
          %p337 = pneg %p81
        $region86: #{tpu_custom_call.1} parent=83 // pred_check_branch
          %339 = sbr.rel (%p337) target = $region88
        $region87: #{tpu_custom_call.1} parent=83 // pred_region
          %s340 = sand.u32 %s66, 1
          %s341 = scalar_lea.sflag [#allocation4], %s340
          %s342 = sand.u32 %s66, 1
          %s343 = smul.addr %s342, 64
          %s344 = scalar_lea.vmem [#allocation3], %s343
          %345 = dma.done %s341, 1024
        $region88: #{tpu_custom_call.1} parent=83 // pred_fallthru
          _
      $region84: #{tpu_custom_call.1} parent=5 // pred_fallthru
        _
    $region6: #{tpu_custom_call.1} parent=1 // loop_footer
      %s14 = sadd.s32 1, %s10
    $region7: #{tpu_custom_call.1} parent=1 // loop_footer_branch
      %9 = sbr.rel target = $region3
    $region8: #{tpu_custom_call.1} parent=1 // loop_exit
      _
    %346 = vsyncpa [#allocation4], 1
    %s347 = scalar_lea.sflag [#allocation4], 1
    %348 = vsyncpa %s347, 1

</llo_original>
